<compile_context>
chip_gen: v7x
topology: tpu7x:2x2x1
jax: 0.10.0
libtpu: 0.0.40
codegen_flags: <defaults>
</compile_context>

<pallas_src>
import functools

import jax
import jax.numpy as jnp
from jax.experimental import pallas as pl
from jax.experimental.pallas import tpu as pltpu

GAMMA = 2  # matches FocalLoss(gamma=2) default
# TODO(synk): `weight` / `ignore_index` ctor args are unused by the PyTorch
# forward() above, so they are intentionally not implemented here.


def _round_up(a, m):
    return (a + m - 1) // m * m


def _as_int_gamma(gamma):
    if isinstance(gamma, int):
        return gamma
    if isinstance(gamma, float) and float(gamma).is_integer():
        return int(gamma)
    return None


def _pow(x, gamma):
    """x ** gamma. Integer gamma stays on the VPU (repeated multiplies)."""
    g = _as_int_gamma(gamma)
    if g is None or g < 0:
        return x ** gamma  # falls back to exp(gamma * log x) on the EUP
    if g == 0:
        return jnp.ones_like(x)
    r = x
    for _ in range(g - 1):
        r = r * x
    return r


def _focal_loss_kernel(x_ref, t_ref, o_ref, *, gamma, n_rows, block_rows,
                       blocks_per_split, needs_mask, unroll):
    c = pl.program_id(0)          # core-split axis ("parallel")
    i = pl.program_id(1)          # row-block axis  ("arbitrary", reduction)

    @pl.when(i == 0)
    def _():
        o_ref[...] = jnp.zeros_like(o_ref)

    block = c * blocks_per_split + i        # logical (unclamped) block index
    row0 = block * block_rows               # first global row of this block
    d = x_ref.shape[1]
    n_chunks = block_rows // 8

    def partial_sum(masked):
        # Accumulate 8-row (vreg-tall) slices into an (8, d) carry that lives
        # in vregs; the (block_rows, d) loss is never materialized to VMEM.
        def body(s, acc):
            r = pl.multiple_of(s * 8, 8)
            x = x_ref[pl.ds(r, 8), :].astype(jnp.float32)
            t = t_ref[pl.ds(r, 8), :].astype(jnp.float32)
            mx = 1.0 - x
            lx = jnp.log(x)
            lmx = jnp.log(mx)
            p = _pow(x, gamma)
            q = _pow(mx, gamma)
            a = p * lmx
            # Positive-signed accumulation; loss = -(val). Sign applied once
            # outside the kernel.  val == t*q*log(x) + (1-t)*p*log(1-x).
            val = t * (q * lx - a) + a
            if masked:
                # Zero rows past the real N (ragged / padded block). Must stay
                # between the loss expression and the accumulate.
                local = jax.lax.broadcasted_iota(jnp.int32, (8, 1), 0)
                grow = row0 + r + local
                val = jnp.where(grow < n_rows, val, 0.0)
            return acc + val

        init = jnp.zeros((8, d), jnp.float32)
        return jax.lax.fori_loop(0, n_chunks, body, init,
                                 unroll=min(unroll, n_chunks))

    if needs_mask:
        # Only blocks that overhang N pay for the iota/compare/where.
        is_ragged = row0 + block_rows > n_rows

        @pl.when(is_ragged)
        def _():
            o_ref[...] += partial_sum(True)

        @pl.when(jnp.logical_not(is_ragged))
        def _():
            o_ref[...] += partial_sum(False)
    else:
        o_ref[...] += partial_sum(False)


def focal_loss(input_, target, *, gamma=GAMMA, max_rows=1024,
               core_parallel=False, unroll=4):
    """Pallas implementation of FocalLoss.forward. Returns a scalar mean loss.

    max_rows=1024 -> 4 MiB f32 per input block; two inputs double-buffered is
    16 MiB VMEM, safe on v5e/v6e/v7x.  bf16 inputs are accepted (the kernel
    casts to f32 and accumulates in f32), halving HBM traffic on v5e/v6e.
    Set core_parallel=True on dual-TensorCore parts (v7x) to force the split
    axis onto both cores.
    """
    assert input_.shape == target.shape
    assert input_.ndim == 2
    N, D = input_.shape

    # --- Tiling: row blocks (multiple of 8 rows) split 2 ways across cores.
    rows8 = _round_up(max(N, 1), 8)
    chunks = rows8 // 8
    num_splits = 2 if chunks >= 2 else 1
    chunks_per_split = pl.cdiv(chunks, num_splits)
    rows_per_split = chunks_per_split * 8
    row_tile = min(_round_up(max_rows, 8), rows_per_split)
    blocks_per_split = pl.cdiv(rows_per_split, row_tile)
    # Re-balance the tile so both splits get an equal block count and the
    # total overhang stays below 8 rows per block (no idle-core fallback).
    row_tile = _round_up(pl.cdiv(rows_per_split, blocks_per_split), 8)
    num_blocks = num_splits * blocks_per_split
    needs_mask = (num_blocks * row_tile) != N
    last_block = max((N - 1) // row_tile, 0)

    kernel = functools.partial(
        _focal_loss_kernel, gamma=gamma, n_rows=N, block_rows=row_tile,
        blocks_per_split=blocks_per_split, needs_mask=needs_mask,
        unroll=unroll)

    def in_map(c, i):
        b = c * blocks_per_split + i
        # Clamp grid-padding (phantom) blocks onto the last real block; their
        # contribution is masked to zero inside the kernel.
        return (jnp.minimum(b, last_block), 0)

    # VMEM: 2 inputs x 2 buffers x block + double-buffered (8, D) output,
    # plus headroom for compiler scratch / loop spills.
    in_block_bytes = row_tile * D * (input_.dtype.itemsize
                                     + target.dtype.itemsize)
    vmem_limit = int(2 * in_block_bytes + 2 * 8 * D * 4 + 8 * 1024 * 1024)

    cost = pl.CostEstimate(
        flops=10 * N * D,
        transcendentals=2 * N * D,
        bytes_accessed=(input_.size * input_.dtype.itemsize
                        + target.size * target.dtype.itemsize
                        + num_splits * 8 * D * 4))

    if core_parallel:
        dim_sem = (pltpu.CORE_PARALLEL, pltpu.ARBITRARY)
    else:
        dim_sem = ("parallel", "arbitrary")

    partials = pl.pallas_call(
        kernel,
        out_shape=jax.ShapeDtypeStruct((num_splits * 8, D), jnp.float32),
        grid_spec=pltpu.PrefetchScalarGridSpec(
            num_scalar_prefetch=0,
            grid=(num_splits, blocks_per_split),
            in_specs=[
                pl.BlockSpec((row_tile, D), in_map),
                pl.BlockSpec((row_tile, D), in_map),
            ],
            # Lane-dense (8, D) partial sums per split; reduce outside.
            out_specs=pl.BlockSpec((8, D), lambda c, i: (c, 0)),
        ),
        compiler_params=pltpu.CompilerParams(
            dimension_semantics=dim_sem,
            vmem_limit_bytes=vmem_limit,
        ),
        cost_estimate=cost,
    )(input_, target)

    # Sign flip deferred from the kernel; divide by N then D (each exact in
    # f32) instead of the possibly-inexact N*D.
    total = jnp.sum(partials, dtype=jnp.float32)
    return -(total / N) / D


def _reference(x, t, gamma=GAMMA):
    mx = 1.0 - x
    return jnp.mean(-t * mx ** gamma * jnp.log(x)
                    - (1.0 - t) * x ** gamma * jnp.log(mx))


if __name__ == "__main__":
    key = jax.random.PRNGKey(0)
    eps = 1e-4
    D = 1024  # module docstring says [N, 1024]

    def make_inputs(k, n):
        k1, k2 = jax.random.split(k)
        # input_ must lie strictly in (0, 1) so log(x)/log(1-x) are finite.
        x = jax.random.uniform(k1, (n, D), jnp.float32,
                               minval=eps, maxval=1.0 - eps)
        t = jax.random.uniform(k2, (n, D), jnp.float32,
                               minval=0.0, maxval=1.0)
        return x, t

    # 1) Two exact 8-row blocks, one per split, no masking.
    k, key = jax.random.split(key)
    x1, t1 = make_inputs(k, 16)
    r1 = jax.block_until_ready(focal_loss(x1, t1))
    ref1 = _reference(x1, t1)
    assert jnp.allclose(r1, ref1, rtol=1e-5, atol=1e-6), (r1, ref1)

    # 2) Multi-block per split + ragged last block (N=28, tile=8 -> 4 blocks).
    k, key = jax.random.split(key)
    x2, t2 = make_inputs(k, 28)
    r2 = jax.block_until_ready(focal_loss(x2, t2, max_rows=8))
    ref2 = _reference(x2, t2)
    assert jnp.allclose(r2, ref2, rtol=1e-5, atol=1e-6), (r2, ref2)

    # 3) N not a multiple of 8: second block overhangs (rows 12..15 masked).
    k, key = jax.random.split(key)
    x3, t3 = make_inputs(k, 12)
    r3 = jax.block_until_ready(focal_loss(x3, t3))
    ref3 = _reference(x3, t3)
    assert jnp.allclose(r3, ref3, rtol=1e-5, atol=1e-6), (r3, ref3)

    # 4) Multi-chunk fori_loop inside each block (N=100, tile=32, 4 chunks).
    k, key = jax.random.split(key)
    x4, t4 = make_inputs(k, 100)
    r4 = jax.block_until_ready(focal_loss(x4, t4, max_rows=32))
    ref4 = _reference(x4, t4)
    assert jnp.allclose(r4, ref4, rtol=1e-5, atol=1e-6), (r4, ref4)

    print("KERNEL_OK")
</pallas_src>

<mosaic_0001>
module attributes {stable_mosaic.version = 11 : i64} {
  func.func @_focal_loss_kernel(%arg0: i32, %arg1: i32, %arg2: memref<8x1024xf32, #tpu.memory_space<vmem>>, %arg3: memref<8x1024xf32, #tpu.memory_space<vmem>>, %arg4: memref<8x1024xf32, #tpu.memory_space<vmem>>) attributes {dimension_semantics = [#tpu.dimension_semantics<parallel>, #tpu.dimension_semantics<arbitrary>], iteration_bounds = array<i64: 2, 1>, scalar_prefetch = 0 : i64, scratch_operands = 0 : i64, tpu.core_type = #tpu.core_type<tc>, window_params = [{transform_indices = @transform_0, window_bounds = array<i64: 8, 1024>}, {transform_indices = @transform_1, window_bounds = array<i64: 8, 1024>}, {transform_indices = @transform_2, window_bounds = array<i64: 8, 1024>}]} {
    %c0_i32 = arith.constant 0 : i32
    %0 = arith.cmpi eq, %arg1, %c0_i32 : i32
    %1 = arith.extui %0 : i1 to i32
    %c0_i32_0 = arith.constant 0 : i32
    %2 = arith.cmpi ne, %1, %c0_i32_0 : i32
    scf.if %2 {
      %cst_8 = arith.constant 0.000000e+00 : f32
      %25 = vector.broadcast %cst_8 : f32 to vector<8x1024xf32>
      %c0_9 = arith.constant 0 : index
      %c0_10 = arith.constant 0 : index
      %26 = vector.load %arg4[%c0_9, %c0_10] : memref<8x1024xf32, #tpu.memory_space<vmem>>, vector<8x1024xf32>
      tpu.vector_store %arg4[%c0_9, %c0_10], %25 {strides = array<i32>} : memref<8x1024xf32, #tpu.memory_space<vmem>>, vector<8x1024xf32>,
    } else {
    }
    %c0 = arith.constant 0 : index
    %c0_1 = arith.constant 0 : index
    %3 = vector.load %arg4[%c0, %c0_1] : memref<8x1024xf32, #tpu.memory_space<vmem>>, vector<8x1024xf32>
    %cst = arith.constant 0.000000e+00 : f32
    %4 = vector.broadcast %cst : f32 to vector<8x1024xf32>
    %c0_i32_2 = arith.constant 0 : i32
    %c8_i32 = arith.constant 8 : i32
    %5 = arith.muli %c0_i32_2, %c8_i32 : i32
    %6 = tpu.assume_multiple %5, 8 : i32
    %7 = arith.index_cast %6 : i32 to index
    %c0_3 = arith.constant 0 : index
    %8 = vector.load %arg2[%7, %c0_3] : memref<8x1024xf32, #tpu.memory_space<vmem>>, vector<8x1024xf32>
    %9 = arith.index_cast %6 : i32 to index
    %c0_4 = arith.constant 0 : index
    %10 = vector.load %arg3[%9, %c0_4] : memref<8x1024xf32, #tpu.memory_space<vmem>>, vector<8x1024xf32>
    %cst_5 = arith.constant 1.000000e+00 : f32
    %11 = vector.broadcast %cst_5 : f32 to vector<8x1024xf32>
    %12 = arith.subf %11, %8 : vector<8x1024xf32>
    %13 = math.log %8 : vector<8x1024xf32>
    %14 = math.log %12 : vector<8x1024xf32>
    %15 = arith.mulf %8, %8 : vector<8x1024xf32>
    %16 = arith.mulf %12, %12 : vector<8x1024xf32>
    %17 = arith.mulf %15, %14 : vector<8x1024xf32>
    %18 = arith.mulf %16, %13 : vector<8x1024xf32>
    %19 = arith.subf %18, %17 : vector<8x1024xf32>
    %20 = arith.mulf %10, %19 : vector<8x1024xf32>
    %21 = arith.addf %20, %17 : vector<8x1024xf32>
    %22 = arith.addf %4, %21 : vector<8x1024xf32>
    %c1_i32 = arith.constant 1 : i32
    %23 = arith.addf %3, %22 : vector<8x1024xf32>
    %c0_6 = arith.constant 0 : index
    %c0_7 = arith.constant 0 : index
    %24 = vector.load %arg4[%c0_6, %c0_7] : memref<8x1024xf32, #tpu.memory_space<vmem>>, vector<8x1024xf32>
    tpu.vector_store %arg4[%c0_6, %c0_7], %23 {strides = array<i32>} : memref<8x1024xf32, #tpu.memory_space<vmem>>, vector<8x1024xf32>,
    return
  }
  func.func @transform_0(%arg0: i32, %arg1: i32) -> (i32, i32) {
    %c1_i32 = arith.constant 1 : i32
    %0 = arith.muli %arg0, %c1_i32 : i32
    %1 = arith.addi %0, %arg1 : i32
    %c1_i32_0 = arith.constant 1 : i32
    %2 = arith.minsi %1, %c1_i32_0 : i32
    %c0_i32 = arith.constant 0 : i32
    %c0_i32_1 = arith.constant 0 : i32
    return %2, %c0_i32 : i32, i32
  }
  func.func @transform_1(%arg0: i32, %arg1: i32) -> (i32, i32) {
    %c1_i32 = arith.constant 1 : i32
    %0 = arith.muli %arg0, %c1_i32 : i32
    %1 = arith.addi %0, %arg1 : i32
    %c1_i32_0 = arith.constant 1 : i32
    %2 = arith.minsi %1, %c1_i32_0 : i32
    %c0_i32 = arith.constant 0 : i32
    %c0_i32_1 = arith.constant 0 : i32
    return %2, %c0_i32 : i32, i32
  }
  func.func @transform_2(%arg0: i32, %arg1: i32) -> (i32, i32) {
    %c0_i32 = arith.constant 0 : i32
    %c0_i32_0 = arith.constant 0 : i32
    return %arg0, %c0_i32 : i32, i32
  }
}

</mosaic_0001>

<llo_original>
// kernel: tpu_custom_call.1
$region0: #{tpu_custom_call.1}
  #allocation0 [shape = 'u32[]', space=smem, size = 0x4, offset = 0x4, fixed_abs, tag = 'smem constant byte address 0x4 - core index']
  #allocation1 [shape = 'u32[144,128]{1,0:T(1,128)}', space=vmem, size = 0x12000, scoped, tag = 'internal scratch']
  %s0 = inlined_call_operand.hbm [shape: f32[16,1024], index: 0, kind: input, shape index: {}]
  %s1 = inlined_call_operand.hbm [shape: f32[16,1024], index: 1, kind: input, shape index: {}]
  %s2 = inlined_call_operand.hbm [shape: f32[16,1024], index: 2, kind: output, shape index: {}]
  %s3 = sld [smem:[#allocation0]]
  $region53: #{tpu_custom_call.1} parent=0
    _
  %s5 = ssub.s32 1, %s3
  %s6 = scalar_select 0, %s5, %s3
  $region1: #{tpu_custom_call.1} parent=0
    #allocation2 [shape = 'u8[65536]{0}', space=vmem, size = 0x10000, scoped, tag = 'input window, operand 0']
    #allocation3 [shape = 's32[2]{0}', space=sflag, size = 0x8, scoped, tag = 'scoped memory for tpu_custom_call.1']
    #allocation4 [shape = 's32[2]{0}', space=sflag, size = 0x8, scoped, tag = 'scoped memory for tpu_custom_call.1']
    #allocation5 [shape = 'u8[65536]{0}', space=vmem, size = 0x10000, scoped, tag = 'input window, operand 1']
    #allocation6 [shape = 's32[2]{0}', space=sflag, size = 0x8, scoped, tag = 'scoped memory for tpu_custom_call.1']
    #allocation7 [shape = 'u8[65536]{0}', space=vmem, size = 0x10000, scoped, tag = 'output window, operand 0']
    %7 = vsyncpa [#allocation3], 0
    %s8 = scalar_lea.sflag [#allocation3], 1
    %9 = vsyncpa %s8, 0
    %10 = vsyncpa [#allocation6], 0
    %s11 = scalar_lea.sflag [#allocation6], 1
    %12 = vsyncpa %s11, 0
    %13 = vsyncpa [#allocation4], 0
    %s14 = scalar_lea.sflag [#allocation4], 1
    %15 = vsyncpa %s14, 0
    loop: start=0, step=1, limit=4
    $region2: #{tpu_custom_call.1} parent=1 // loop_pre_header
      _
    $region3: #{tpu_custom_call.1} parent=1 // loop_header
      %s17 = sphi 0, %s21
      %p18 = scmp.ge.s32.totalorder %s17, 4
      %s24 = sphi 0, %s36
      %s25 = sphi 0, %s32
      %s26 = sphi 0, %s24
      %s27 = sphi 0, %s25
      %s28 = sphi 0, %s26
      %s29 = sphi 0, %s27
      %s45 = sphi 0, %s47
      %s48 = sphi 0, %s45
      %s49 = sphi 0, %s48
      %s65 = sphi 0, %s49
      %s77 = sphi 0, %s79
      %s80 = sphi 0, %s77
      %s81 = sphi 0, %s80
      %s97 = sphi 0, %s81
      %s103 = sphi 0, %s105
      %s106 = sphi 0, %s103
      %s107 = sphi 0, %s106
      %s123 = sphi 0, %s107
    $region4: #{tpu_custom_call.1} parent=1 // loop_header_branch
      %20 = sbr.rel (%p18) target = $region8
    $region5: #{tpu_custom_call.1} parent=1 // loop_body
      %s22 = ssub.s32 %s17, 1
      %s23 = ssub.s32 %s17, 2
      %s30 = sadd.s32 1, %s25
      %p31 = scmp.ge.s32.totalorder %s30, 1
      %s32 = scalar_select %p31, 0, %s30
      %s33 = sadd.s32 1, %s24
      %s34 = scalar_select %p31, %s33, %s24
      %p35 = scmp.ge.s32.totalorder %s34, 2
      %s36 = scalar_select %p35, 0, %s34
      %s37 = sadd.s32 %s24, %s25
      %p38 = scmp.lt.s32.totalorder %s37, 1
      %s39 = scalar_select %p38, %s37, 1
      %s40 = sadd.s32 %s36, %s32
      %p41 = scmp.lt.s32.totalorder %s40, 1
      %s42 = scalar_select %p41, %s40, 1
      %s43 = ssub.s32 %s39, %s42
      %p44 = scmp.eq.s32.totalorder %s43, 0
      %s46 = sadd.s32 %s45, 1
      %s47 = scalar_select %p44, %s45, %s46
      %p50 = pneg %p44
      %p51 = scmp.eq.s32.totalorder %s17, 1
      %p52 = por %p50, %p51
      %p53 = scmp.ne.s32.totalorder %s45, %s48
      %p54 = scmp.eq.s32.totalorder %s17, 0
      %p55 = por %p53, %p54
      %p56 = scmp.ne.s32.totalorder %s45, %s48
      %p57 = scmp.eq.s32.totalorder %s22, 1
      %p58 = por %p56, %p57
      %p59 = scmp.ne.s32.totalorder %s48, %s49
      %p60 = scmp.eq.s32.totalorder %s22, 0
      %p61 = por %p59, %p60
      %p62 = scmp.ne.s32.totalorder %s48, %s49
      %p63 = scmp.eq.s32.totalorder %s23, 1
      %p64 = por %p62, %p63
      %p66 = scmp.ne.s32.totalorder %s49, %s65
      %p67 = scmp.eq.s32.totalorder %s23, 0
      %p68 = por %p66, %p67
      %s69 = sadd.s32 %s24, %s25
      %p70 = scmp.lt.s32.totalorder %s69, 1
      %s71 = scalar_select %p70, %s69, 1
      %s72 = sadd.s32 %s36, %s32
      %p73 = scmp.lt.s32.totalorder %s72, 1
      %s74 = scalar_select %p73, %s72, 1
      %s75 = ssub.s32 %s71, %s74
      %p76 = scmp.eq.s32.totalorder %s75, 0
      %s78 = sadd.s32 %s77, 1
      %s79 = scalar_select %p76, %s77, %s78
      %p82 = pneg %p76
      %p83 = scmp.eq.s32.totalorder %s17, 1
      %p84 = por %p82, %p83
      %p85 = scmp.ne.s32.totalorder %s77, %s80
      %p86 = scmp.eq.s32.totalorder %s17, 0
      %p87 = por %p85, %p86
      %p88 = scmp.ne.s32.totalorder %s77, %s80
      %p89 = scmp.eq.s32.totalorder %s22, 1
      %p90 = por %p88, %p89
      %p91 = scmp.ne.s32.totalorder %s80, %s81
      %p92 = scmp.eq.s32.totalorder %s22, 0
      %p93 = por %p91, %p92
      %p94 = scmp.ne.s32.totalorder %s80, %s81
      %p95 = scmp.eq.s32.totalorder %s23, 1
      %p96 = por %p94, %p95
      %p98 = scmp.ne.s32.totalorder %s81, %s97
      %p99 = scmp.eq.s32.totalorder %s23, 0
      %p100 = por %p98, %p99
      %s101 = ssub.s32 %s24, %s36
      %p102 = scmp.eq.s32.totalorder %s101, 0
      %s104 = sadd.s32 %s103, 1
      %s105 = scalar_select %p102, %s103, %s104
      %p108 = pneg %p102
      %p109 = scmp.eq.s32.totalorder %s17, 1
      %p110 = por %p108, %p109
      %p111 = scmp.ne.s32.totalorder %s103, %s106
      %p112 = scmp.eq.s32.totalorder %s17, 0
      %p113 = por %p111, %p112
      %p114 = scmp.ne.s32.totalorder %s103, %s106
      %p115 = scmp.eq.s32.totalorder %s22, 1
      %p116 = por %p114, %p115
      %p117 = scmp.ne.s32.totalorder %s106, %s107
      %p118 = scmp.eq.s32.totalorder %s22, 0
      %p119 = por %p117, %p118
      %p120 = scmp.ne.s32.totalorder %s106, %s107
      %p121 = scmp.eq.s32.totalorder %s23, 1
      %p122 = por %p120, %p121
      %p124 = scmp.ne.s32.totalorder %s107, %s123
      %p125 = scmp.eq.s32.totalorder %s23, 0
      %p126 = por %p124, %p125
      %p127 = scmp.le.s32.totalorder 1, %s17
      %p128 = scmp.lt.s32.totalorder %s17, 3
      %p129 = pnand %p127, %p128
      %p130 = pneg %p129
      // Predicated region
      $region9: #{tpu_custom_call.1} parent=5 // pred_check
        _
      $region10: #{tpu_custom_call.1} parent=5 // pred_check_branch
        %132 = sbr.rel (%p129) target = $region12
      $region11: #{tpu_custom_call.1} parent=5 // pred_region
        %s133 = ssub.s32 %s17, 1
      $region12: #{tpu_custom_call.1} parent=5 // pred_fallthru
        _
      %p134 = scmp.lt.s32.totalorder %s17, 2
      // Predicated region
      $region13: #{tpu_custom_call.1} parent=5 // pred_check
        %p135 = pneg %p134
      $region14: #{tpu_custom_call.1} parent=5 // pred_check_branch
        %137 = sbr.rel (%p135) target = $region16
      $region15: #{tpu_custom_call.1} parent=5 // pred_region
        // Predicated region
        $region17: #{tpu_custom_call.1} parent=15 // pred_check
          %p138 = pneg %p55
        $region18: #{tpu_custom_call.1} parent=15 // pred_check_branch
          %140 = sbr.rel (%p138) target = $region20
        $region19: #{tpu_custom_call.1} parent=15 // pred_region
          %s141 = sand.u32 %s45, 1
          %s142 = scalar_lea.sflag [#allocation3], %s141
          %s143 = sand.u32 %s45, 1
          %s144 = smul.addr %s143, 64
          %s145 = scalar_lea.vmem [#allocation2], %s144
          %s146 = sadd.s32 %s24, %s25
          %p147 = scmp.lt.s32.totalorder %s146, 1
          %s148 = scalar_select %p147, %s146, 1
          %s150 = ssub.s32 1024, 1024
          %151 = vsyncadd %s142, %s150
          %s152 = smul.addr %s148, 8
          %s153 = smul.addr %s152, 128
          %s154 = scalar_lea.hbm %s0, %s153
          %s156 = sshll.u32 %s145, 4
          %s157 = int_to_ptr.vmem [resolvable:$true] %s156
          %159 = dma.hbm_to_vmem [thread:$0]  %s154, 1024, %s157, %s142
        $region20: #{tpu_custom_call.1} parent=15 // pred_fallthru
          _
        // Predicated region
        $region21: #{tpu_custom_call.1} parent=15 // pred_check
          %p160 = pneg %p87
        $region22: #{tpu_custom_call.1} parent=15 // pred_check_branch
          %162 = sbr.rel (%p160) target = $region24
        $region23: #{tpu_custom_call.1} parent=15 // pred_region
          %s163 = sand.u32 %s77, 1
          %s164 = scalar_lea.sflag [#allocation6], %s163
          %s165 = sand.u32 %s77, 1
          %s166 = smul.addr %s165, 64
          %s167 = scalar_lea.vmem [#allocation5], %s166
          %s168 = sadd.s32 %s24, %s25
          %p169 = scmp.lt.s32.totalorder %s168, 1
          %s170 = scalar_select %p169, %s168, 1
          %s172 = ssub.s32 1024, 1024
          %173 = vsyncadd %s164, %s172
          %s174 = smul.addr %s170, 8
          %s175 = smul.addr %s174, 128
          %s176 = scalar_lea.hbm %s1, %s175
          %s178 = sshll.u32 %s167, 4
          %s179 = int_to_ptr.vmem [resolvable:$true] %s178
          %181 = dma.hbm_to_vmem [thread:$0]  %s176, 1024, %s179, %s164
        $region24: #{tpu_custom_call.1} parent=15 // pred_fallthru
          _
      $region16: #{tpu_custom_call.1} parent=5 // pred_fallthru
        _
      %p182 = scmp.le.s32.totalorder 1, %s17
      %p183 = scmp.lt.s32.totalorder %s17, 3
      %p184 = pnand %p182, %p183
      %p185 = pneg %p184
      // Predicated region
      $region25: #{tpu_custom_call.1} parent=5 // pred_check
        _
      $region26: #{tpu_custom_call.1} parent=5 // pred_check_branch
        %187 = sbr.rel (%p184) target = $region28
      $region27: #{tpu_custom_call.1} parent=5 // pred_region
        %s188 = ssub.s32 %s17, 1
        %s189 = sand.u32 %s48, 1
        %s190 = scalar_lea.sflag [#allocation3], %s189
        %s191 = sand.u32 %s48, 1
        %s192 = smul.addr %s191, 64
        %s193 = scalar_lea.vmem [#allocation2], %s192
        // Predicated region
        $region29: #{tpu_custom_call.1} parent=27 // pred_check
          %p194 = pneg %p61
        $region30: #{tpu_custom_call.1} parent=27 // pred_check_branch
          %196 = sbr.rel (%p194) target = $region32
        $region31: #{tpu_custom_call.1} parent=27 // pred_region
          %197 = dma.done %s190, 1024
        $region32: #{tpu_custom_call.1} parent=27 // pred_fallthru
          _
        %s198 = sand.u32 %s80, 1
        %s199 = scalar_lea.sflag [#allocation6], %s198
        %s200 = sand.u32 %s80, 1
        %s201 = smul.addr %s200, 64
        %s202 = scalar_lea.vmem [#allocation5], %s201
        // Predicated region
        $region33: #{tpu_custom_call.1} parent=27 // pred_check
          %p203 = pneg %p93
        $region34: #{tpu_custom_call.1} parent=27 // pred_check_branch
          %205 = sbr.rel (%p203) target = $region36
        $region35: #{tpu_custom_call.1} parent=27 // pred_region
          %206 = dma.done %s199, 1024
        $region36: #{tpu_custom_call.1} parent=27 // pred_fallthru
          _
        %s207 = sand.u32 %s48, 1
        %s208 = scalar_lea.sflag [#allocation3], %s207
        %s209 = sand.u32 %s48, 1
        %s210 = smul.addr %s209, 64
        %s211 = scalar_lea.vmem [#allocation2], %s210
        %p212 = pneg %p61
        %p213 = pneg %p58
        %s214 = sand.u32 %s80, 1
        %s215 = scalar_lea.sflag [#allocation6], %s214
        %s216 = sand.u32 %s80, 1
        %s217 = smul.addr %s216, 64
        %s218 = scalar_lea.vmem [#allocation5], %s217
        %p219 = pneg %p93
        %p220 = pneg %p90
        %p221 = pneg %p119
        %p222 = pneg %p116
        %s223 = sand.u32 %s106, 1
        %s224 = scalar_lea.sflag [#allocation4], %s223
        %s225 = sand.u32 %s106, 1
        %s226 = smul.addr %s225, 64
        %s227 = scalar_lea.vmem [#allocation7], %s226
        %s228 = sadd.s32 %s26, %s27
        %p229 = scmp.lt.s32.totalorder %s228, 1
        %s230 = scalar_select %p229, %s228, 1
        %s231 = sadd.s32 %s26, %s27
        %p232 = scmp.lt.s32.totalorder %s231, 1
        %s233 = scalar_select %p232, %s231, 1
        %p234 = scmp.eq.s32.totalorder %s27, 0
        // Predicated region
        $region37: #{tpu_custom_call.1} parent=27 // pred_check
          %p235 = pneg %p234
        $region38: #{tpu_custom_call.1} parent=27 // pred_check_branch
          %237 = sbr.rel (%p235) target = $region40
        $region39: #{tpu_custom_call.1} parent=27 // pred_region
          %238 = vst [vmem:[%s227] sm:$0xff] 0.0
          %239 = vst [vmem:[%s227 + $0x8] sm:$0xff] 0.0
          %240 = vst [vmem:[%s227 + $0x10] sm:$0xff] 0.0
          %241 = vst [vmem:[%s227 + $0x18] sm:$0xff] 0.0
          %242 = vst [vmem:[%s227 + $0x20] sm:$0xff] 0.0
          %243 = vst [vmem:[%s227 + $0x28] sm:$0xff] 0.0
          %244 = vst [vmem:[%s227 + $0x30] sm:$0xff] 0.0
          %245 = vst [vmem:[%s227 + $0x38] sm:$0xff] 0.0
        $region40: #{tpu_custom_call.1} parent=27 // pred_fallthru
          _
        %v246 = vld [vmem:[%s227] sm:$0xff]
        %v247 = vld [vmem:[%s227 + $0x8] sm:$0xff]
        %v248 = vld [vmem:[%s227 + $0x10] sm:$0xff]
        %v249 = vld [vmem:[%s227 + $0x18] sm:$0xff]
        %v250 = vld [vmem:[%s227 + $0x20] sm:$0xff]
        %v251 = vld [vmem:[%s227 + $0x28] sm:$0xff]
        %v252 = vld [vmem:[%s227 + $0x30] sm:$0xff]
        %v253 = vld [vmem:[%s227 + $0x38] sm:$0xff]
        %s254 = smul.u32 0, 8
        %s255 = smul.addr %s254, 8
        %s256 = scalar_lea.vmem %s193, %s255 [#allocation2]
        %v257 = vld [vmem:[%s256] sm:$0xff]
        %v258 = vld [vmem:[%s256 + $0x8] sm:$0xff]
        %v259 = vld [vmem:[%s256 + $0x10] sm:$0xff]
        %v260 = vld [vmem:[%s256 + $0x18] sm:$0xff]
        %v261 = vld [vmem:[%s256 + $0x20] sm:$0xff]
        %v262 = vld [vmem:[%s256 + $0x28] sm:$0xff]
        %v263 = vld [vmem:[%s256 + $0x30] sm:$0xff]
        %v264 = vld [vmem:[%s256 + $0x38] sm:$0xff]
        %s265 = smul.addr %s254, 8
        %s266 = scalar_lea.vmem %s202, %s265 [#allocation5]
        %v267 = vld [vmem:[%s266] sm:$0xff]
        %v268 = vld [vmem:[%s266 + $0x8] sm:$0xff]
        %v269 = vld [vmem:[%s266 + $0x10] sm:$0xff]
        %v270 = vld [vmem:[%s266 + $0x18] sm:$0xff]
        %v271 = vld [vmem:[%s266 + $0x20] sm:$0xff]
        %v272 = vld [vmem:[%s266 + $0x28] sm:$0xff]
        %v273 = vld [vmem:[%s266 + $0x30] sm:$0xff]
        %v274 = vld [vmem:[%s266 + $0x38] sm:$0xff]
        %v275 = vsub.f32 1.0, %v257
        %v276 = vsub.f32 1.0, %v258
        %v277 = vsub.f32 1.0, %v259
        %v278 = vsub.f32 1.0, %v260
        %v279 = vsub.f32 1.0, %v261
        %v280 = vsub.f32 1.0, %v262
        %v281 = vsub.f32 1.0, %v263
        %v282 = vsub.f32 1.0, %v264
        %v283 = vlog2.pop %v257
        %v284 = vmul.f32 %v283, 0.6931472
        %v285 = vlog2.pop %v258
        %v286 = vmul.f32 %v285, 0.6931472
        %v287 = vlog2.pop %v259
        %v288 = vmul.f32 %v287, 0.6931472
        %v289 = vlog2.pop %v260
        %v290 = vmul.f32 %v289, 0.6931472
        %v291 = vlog2.pop %v261
        %v292 = vmul.f32 %v291, 0.6931472
        %v293 = vlog2.pop %v262
        %v294 = vmul.f32 %v293, 0.6931472
        %v295 = vlog2.pop %v263
        %v296 = vmul.f32 %v295, 0.6931472
        %v297 = vlog2.pop %v264
        %v298 = vmul.f32 %v297, 0.6931472
        %v299 = vlog2.pop %v275
        %v300 = vmul.f32 %v299, 0.6931472
        %v301 = vlog2.pop %v276
        %v302 = vmul.f32 %v301, 0.6931472
        %v303 = vlog2.pop %v277
        %v304 = vmul.f32 %v303, 0.6931472
        %v305 = vlog2.pop %v278
        %v306 = vmul.f32 %v305, 0.6931472
        %v307 = vlog2.pop %v279
        %v308 = vmul.f32 %v307, 0.6931472
        %v309 = vlog2.pop %v280
        %v310 = vmul.f32 %v309, 0.6931472
        %v311 = vlog2.pop %v281
        %v312 = vmul.f32 %v311, 0.6931472
        %v313 = vlog2.pop %v282
        %v314 = vmul.f32 %v313, 0.6931472
        %v315 = vmul.f32 %v257, %v257
        %v316 = vmul.f32 %v258, %v258
        %v317 = vmul.f32 %v259, %v259
        %v318 = vmul.f32 %v260, %v260
        %v319 = vmul.f32 %v261, %v261
        %v320 = vmul.f32 %v262, %v262
        %v321 = vmul.f32 %v263, %v263
        %v322 = vmul.f32 %v264, %v264
        %v323 = vmul.f32 %v275, %v275
        %v324 = vmul.f32 %v276, %v276
        %v325 = vmul.f32 %v277, %v277
        %v326 = vmul.f32 %v278, %v278
        %v327 = vmul.f32 %v279, %v279
        %v328 = vmul.f32 %v280, %v280
        %v329 = vmul.f32 %v281, %v281
        %v330 = vmul.f32 %v282, %v282
        %v331 = vmul.f32 %v315, %v300
        %v332 = vmul.f32 %v316, %v302
        %v333 = vmul.f32 %v317, %v304
        %v334 = vmul.f32 %v318, %v306
        %v335 = vmul.f32 %v319, %v308
        %v336 = vmul.f32 %v320, %v310
        %v337 = vmul.f32 %v321, %v312
        %v338 = vmul.f32 %v322, %v314
        %v339 = vmul.f32 %v323, %v284
        %v340 = vmul.f32 %v324, %v286
        %v341 = vmul.f32 %v325, %v288
        %v342 = vmul.f32 %v326, %v290
        %v343 = vmul.f32 %v327, %v292
        %v344 = vmul.f32 %v328, %v294
        %v345 = vmul.f32 %v329, %v296
        %v346 = vmul.f32 %v330, %v298
        %v347 = vsub.f32 %v339, %v331
        %v348 = vsub.f32 %v340, %v332
        %v349 = vsub.f32 %v341, %v333
        %v350 = vsub.f32 %v342, %v334
        %v351 = vsub.f32 %v343, %v335
        %v352 = vsub.f32 %v344, %v336
        %v353 = vsub.f32 %v345, %v337
        %v354 = vsub.f32 %v346, %v338
        %v355 = vmul.f32 %v267, %v347
        %v356 = vmul.f32 %v268, %v348
        %v357 = vmul.f32 %v269, %v349
        %v358 = vmul.f32 %v270, %v350
        %v359 = vmul.f32 %v271, %v351
        %v360 = vmul.f32 %v272, %v352
        %v361 = vmul.f32 %v273, %v353
        %v362 = vmul.f32 %v274, %v354
        %v363 = vadd.f32 %v355, %v331
        %v364 = vadd.f32 %v356, %v332
        %v365 = vadd.f32 %v357, %v333
        %v366 = vadd.f32 %v358, %v334
        %v367 = vadd.f32 %v359, %v335
        %v368 = vadd.f32 %v360, %v336
        %v369 = vadd.f32 %v361, %v337
        %v370 = vadd.f32 %v362, %v338
        %v371 = vadd.f32 %v363, 0.0
        %v372 = vadd.f32 %v364, 0.0
        %v373 = vadd.f32 %v365, 0.0
        %v374 = vadd.f32 %v366, 0.0
        %v375 = vadd.f32 %v367, 0.0
        %v376 = vadd.f32 %v368, 0.0
        %v377 = vadd.f32 %v369, 0.0
        %v378 = vadd.f32 %v370, 0.0
        %v379 = vadd.f32 %v246, %v371
        %v380 = vadd.f32 %v247, %v372
        %v381 = vadd.f32 %v248, %v373
        %v382 = vadd.f32 %v249, %v374
        %v383 = vadd.f32 %v250, %v375
        %v384 = vadd.f32 %v251, %v376
        %v385 = vadd.f32 %v252, %v377
        %v386 = vadd.f32 %v253, %v378
        %387 = vst [vmem:[%s227] sm:$0xff] %v379
        %388 = vst [vmem:[%s227 + $0x8] sm:$0xff] %v380
        %389 = vst [vmem:[%s227 + $0x10] sm:$0xff] %v381
        %390 = vst [vmem:[%s227 + $0x18] sm:$0xff] %v382
        %391 = vst [vmem:[%s227 + $0x20] sm:$0xff] %v383
        %392 = vst [vmem:[%s227 + $0x28] sm:$0xff] %v384
        %393 = vst [vmem:[%s227 + $0x30] sm:$0xff] %v385
        %394 = vst [vmem:[%s227 + $0x38] sm:$0xff] %v386
        %s395 = sand.u32 %s106, 1
        %s396 = scalar_lea.sflag [#allocation4], %s395
        %s397 = sand.u32 %s106, 1
        %s398 = smul.addr %s397, 64
        %s399 = scalar_lea.vmem [#allocation7], %s398
        // Predicated region
        $region41: #{tpu_custom_call.1} parent=27 // pred_check
          %p400 = pneg %p116
        $region42: #{tpu_custom_call.1} parent=27 // pred_check_branch
          %402 = sbr.rel (%p400) target = $region44
        $region43: #{tpu_custom_call.1} parent=27 // pred_region
          %s404 = ssub.s32 1024, 1024
          %405 = vsyncadd %s396, %s404
          %s406 = smul.addr %s26, 8
          %s407 = smul.addr %s406, 128
          %s408 = scalar_lea.hbm %s2, %s407
          %s410 = sshll.u32 %s399, 4
          %s411 = int_to_ptr.vmem [resolvable:$true] %s410
          %413 = dma.vmem_to_hbm [thread:$0]  %s411, 1024, %s408, %s396
        $region44: #{tpu_custom_call.1} parent=27 // pred_fallthru
          _
      $region28: #{tpu_custom_call.1} parent=5 // pred_fallthru
        _
      %p414 = scmp.le.s32.totalorder 2, %s17
      // Predicated region
      $region45: #{tpu_custom_call.1} parent=5 // pred_check
        %p415 = pneg %p414
      $region46: #{tpu_custom_call.1} parent=5 // pred_check_branch
        %417 = sbr.rel (%p415) target = $region48
      $region47: #{tpu_custom_call.1} parent=5 // pred_region
        %s418 = ssub.s32 %s17, 2
        // Predicated region
        $region49: #{tpu_custom_call.1} parent=47 // pred_check
          %p419 = pneg %p122
        $region50: #{tpu_custom_call.1} parent=47 // pred_check_branch
          %421 = sbr.rel (%p419) target = $region52
        $region51: #{tpu_custom_call.1} parent=47 // pred_region
          %s422 = sand.u32 %s107, 1
          %s423 = scalar_lea.sflag [#allocation4], %s422
          %s424 = sand.u32 %s107, 1
          %s425 = smul.addr %s424, 64
          %s426 = scalar_lea.vmem [#allocation7], %s425
          %427 = dma.done %s423, 1024
        $region52: #{tpu_custom_call.1} parent=47 // pred_fallthru
          _
      $region48: #{tpu_custom_call.1} parent=5 // pred_fallthru
        _
    $region6: #{tpu_custom_call.1} parent=1 // loop_footer
      %s21 = sadd.s32 1, %s17
    $region7: #{tpu_custom_call.1} parent=1 // loop_footer_branch
      %16 = sbr.rel target = $region3
    $region8: #{tpu_custom_call.1} parent=1 // loop_exit
      _
    %428 = vsyncpa [#allocation3], 1
    %s429 = scalar_lea.sflag [#allocation3], 1
    %430 = vsyncpa %s429, 1
    %431 = vsyncpa [#allocation6], 1
    %s432 = scalar_lea.sflag [#allocation6], 1
    %433 = vsyncpa %s432, 1
    %434 = vsyncpa [#allocation4], 1
    %s435 = scalar_lea.sflag [#allocation4], 1
    %436 = vsyncpa %s435, 1

</llo_original>
